<compile_context>
chip_gen: v7x
topology: tpu7x:2x2x1
jax: 0.10.0
libtpu: 0.0.40
codegen_flags: <defaults>
</compile_context>

<pallas_src>
import functools

import jax
import jax.numpy as jnp
import numpy as np
from jax.experimental import pallas as pl
from jax.experimental.pallas import tpu as pltpu

NUM_LAYERS = 3


def lstm_decoder_kernel(x_ref, h0_ref, c0_ref, w_ref, b_ref,
                        out_ref, hn_ref, cn_ref):
    """Single grid point: full 3-layer LSTM (seq_len=1) + final Linear, all in VMEM.

    w_ref: (L+1, R, 4H)  slab; layer l uses rows [0:in_dim+H] = [W_ih^T; W_hh^T],
                         slab L holds the Linear weight^T in rows [0:H], cols [0:input].
    b_ref: (L+1, 1, 4H)  slab; layer l row = b_ih + b_hh, slab L = linear bias (padded).
    """
    L, _, H = h0_ref.shape
    input_size = x_ref.shape[-1]

    layer_in = x_ref[...].astype(jnp.float32)           # (B, input_size)

    for l in range(L):                                   # static unrolled stack
        in_dim = layer_in.shape[-1]
        h_prev = h0_ref[l].astype(jnp.float32)           # (B, H)
        c_prev = c0_ref[l].astype(jnp.float32)           # (B, H)

        # Fused gate matmul: [x, h] @ [W_ih^T; W_hh^T] + (b_ih + b_hh)
        xh = jnp.concatenate([layer_in, h_prev], axis=-1)            # (B, in_dim+H)
        gates = (
            jnp.dot(xh, w_ref[l, :in_dim + H, :],
                    preferred_element_type=jnp.float32)
            + b_ref[l]                                               # (1, 4H) broadcast
        )                                                            # (B, 4H)

        # Whole-vreg activations: sigmoid via single EUP tanh push, one tanh pass.
        sig_all = 0.5 * jnp.tanh(0.5 * gates) + 0.5                  # == sigmoid(gates)
        tanh_all = jnp.tanh(gates)

        i_g = sig_all[:, 0 * H:1 * H]
        f_g = sig_all[:, 1 * H:2 * H]
        g_g = tanh_all[:, 2 * H:3 * H]
        o_g = sig_all[:, 3 * H:4 * H]

        c_new = f_g * c_prev + i_g * g_g
        h_new = o_g * jnp.tanh(c_new)

        hn_ref[l] = h_new.astype(hn_ref.dtype)
        cn_ref[l] = c_new.astype(cn_ref.dtype)
        layer_in = h_new                                             # next layer input

    # output = h_top @ W_lin^T + b_lin  (weight padded to 4H lanes, slice result)
    out_full = (
        jnp.dot(layer_in, w_ref[L, :H, :], preferred_element_type=jnp.float32)
        + b_ref[L]
    )                                                                # (B, 4H)
    out_ref[...] = out_full[:, :input_size].astype(out_ref.dtype)


def prepare_params(params, input_size, hidden_size):
    """One-time packing of all weights/biases into two contiguous slabs.

    Done once outside the decode loop so the per-step forward does zero
    weight preprocessing (no transposes / bias adds / reshapes per call).
    """
    H = hidden_size
    L = NUM_LAYERS
    assert 4 * H >= input_size, "output padding assumes input_size <= 4*hidden"
    R = max(input_size + H, 2 * H)                       # slab row count

    w_slab = jnp.zeros((L + 1, R, 4 * H), jnp.float32)
    b_slab = jnp.zeros((L + 1, 1, 4 * H), jnp.float32)

    for l in range(L):
        w_ih, w_hh, b_ih, b_hh = params[f"layer{l}"]
        in_dim = input_size if l == 0 else H
        w_cat = jnp.concatenate([w_ih.T, w_hh.T], axis=0)            # (in_dim+H, 4H)
        w_slab = w_slab.at[l, :in_dim + H, :].set(w_cat)
        b_slab = b_slab.at[l, 0, :].set(b_ih + b_hh)

    w_lin, b_lin = params["linear"]
    w_slab = w_slab.at[L, :H, :input_size].set(w_lin.T)              # (H, input) padded
    b_slab = b_slab.at[L, 0, :input_size].set(b_lin)

    return jax.device_put(w_slab), jax.device_put(b_slab)


@jax.jit
def lstm_decoder_forward(x, h0, c0, w_slab, b_slab):
    """Per-step forward: 5 kernel inputs, everything VMEM-resident."""
    B, input_size = x.shape
    L, _, H = h0.shape

    vmem = pl.BlockSpec(memory_space=pltpu.MemorySpace.VMEM)

    out, h_n, c_n = pl.pallas_call(
        lstm_decoder_kernel,
        out_shape=(
            jax.ShapeDtypeStruct((B, input_size), jnp.float32),
            jax.ShapeDtypeStruct((L, B, H), jnp.float32),
            jax.ShapeDtypeStruct((L, B, H), jnp.float32),
        ),
        in_specs=[vmem] * 5,
        out_specs=(vmem, vmem, vmem),
    )(x, h0, c0, w_slab, b_slab)
    return out, (h_n, c_n)


def init_params(key, input_size, hidden_size):
    """Deterministic init matching PyTorch nn.LSTM/nn.Linear default U(-1/sqrt(H), 1/sqrt(H))."""
    params = {}
    k = 1.0 / np.sqrt(hidden_size)
    keys = jax.random.split(key, 4 * NUM_LAYERS + 2)
    for l in range(NUM_LAYERS):
        in_dim = input_size if l == 0 else hidden_size
        kk = keys[4 * l:4 * l + 4]
        params[f"layer{l}"] = (
            jax.random.uniform(kk[0], (4 * hidden_size, in_dim), jnp.float32, -k, k),
            jax.random.uniform(kk[1], (4 * hidden_size, hidden_size), jnp.float32, -k, k),
            jax.random.uniform(kk[2], (4 * hidden_size,), jnp.float32, -k, k),
            jax.random.uniform(kk[3], (4 * hidden_size,), jnp.float32, -k, k),
        )
    params["linear"] = (
        jax.random.uniform(keys[-2], (input_size, hidden_size), jnp.float32, -k, k),
        jax.random.uniform(keys[-1], (input_size,), jnp.float32, -k, k),
    )
    return params


def reference_forward(x, h0, c0, params):
    """Pure-JAX reference implementing PyTorch's LSTM cell math."""
    H = h0.shape[-1]
    layer_in = x
    h_out, c_out = [], []
    for l in range(NUM_LAYERS):
        w_ih, w_hh, b_ih, b_hh = params[f"layer{l}"]
        gates = layer_in @ w_ih.T + h0[l] @ w_hh.T + b_ih + b_hh
        i = jax.nn.sigmoid(gates[:, 0 * H:1 * H])
        f = jax.nn.sigmoid(gates[:, 1 * H:2 * H])
        g = jnp.tanh(gates[:, 2 * H:3 * H])
        o = jax.nn.sigmoid(gates[:, 3 * H:4 * H])
        c = f * c0[l] + i * g
        h = o * jnp.tanh(c)
        h_out.append(h)
        c_out.append(c)
        layer_in = h
    w_lin, b_lin = params["linear"]
    out = layer_in @ w_lin.T + b_lin
    return out, (jnp.stack(h_out), jnp.stack(c_out))


if __name__ == "__main__":
    batch, input_size, hidden_size = 8, 16, 32

    key = jax.random.PRNGKey(0)
    k_p, k_x, k_h, k_c = jax.random.split(key, 4)

    params = init_params(k_p, input_size, hidden_size)
    x = jax.random.normal(k_x, (batch, input_size), jnp.float32)
    h0 = jax.random.normal(k_h, (NUM_LAYERS, batch, hidden_size), jnp.float32)
    c0 = jax.random.normal(k_c, (NUM_LAYERS, batch, hidden_size), jnp.float32)

    # One-time param preparation (hoisted out of the per-step call).
    w_slab, b_slab = prepare_params(params, input_size, hidden_size)

    out, (h_n, c_n) = lstm_decoder_forward(x, h0, c0, w_slab, b_slab)
    jax.block_until_ready((out, h_n, c_n))

    out_ref, (h_ref, c_ref) = reference_forward(x, h0, c0, params)
    np.testing.assert_allclose(np.asarray(out), np.asarray(out_ref), rtol=1e-5, atol=1e-5)
    np.testing.assert_allclose(np.asarray(h_n), np.asarray(h_ref), rtol=1e-5, atol=1e-5)
    np.testing.assert_allclose(np.asarray(c_n), np.asarray(c_ref), rtol=1e-5, atol=1e-5)

    print("KERNEL_OK")
</pallas_src>

<mosaic_0001>
module attributes {stable_mosaic.version = 11 : i64} {
  func.func @lstm_decoder_kernel(%arg0: memref<8x16xf32, #tpu.memory_space<vmem>>, %arg1: memref<3x8x32xf32, #tpu.memory_space<vmem>>, %arg2: memref<3x8x32xf32, #tpu.memory_space<vmem>>, %arg3: memref<4x64x128xf32, #tpu.memory_space<vmem>>, %arg4: memref<4x1x128xf32, #tpu.memory_space<vmem>>, %arg5: memref<8x16xf32, #tpu.memory_space<vmem>>, %arg6: memref<3x8x32xf32, #tpu.memory_space<vmem>>, %arg7: memref<3x8x32xf32, #tpu.memory_space<vmem>>) attributes {dimension_semantics = [], scalar_prefetch = 0 : i64, scratch_operands = 0 : i64, tpu.core_type = #tpu.core_type<tc>} {
    %c0 = arith.constant 0 : index
    %c0_0 = arith.constant 0 : index
    %0 = vector.load %arg0[%c0, %c0_0] : memref<8x16xf32, #tpu.memory_space<vmem>>, vector<8x16xf32>
    %c0_1 = arith.constant 0 : index
    %c0_2 = arith.constant 0 : index
    %c0_3 = arith.constant 0 : index
    %1 = vector.load %arg1[%c0_1, %c0_2, %c0_3] : memref<3x8x32xf32, #tpu.memory_space<vmem>>, vector<1x8x32xf32>
    %2 = vector.shape_cast %1 : vector<1x8x32xf32> to vector<8x32xf32>
    %c0_4 = arith.constant 0 : index
    %c0_5 = arith.constant 0 : index
    %c0_6 = arith.constant 0 : index
    %3 = vector.load %arg2[%c0_4, %c0_5, %c0_6] : memref<3x8x32xf32, #tpu.memory_space<vmem>>, vector<1x8x32xf32>
    %4 = vector.shape_cast %3 : vector<1x8x32xf32> to vector<8x32xf32>
    %5 = tpu.concatenate %0, %2 in 1 : vector<8x16xf32>, vector<8x32xf32> -> vector<8x48xf32>
    %c0_7 = arith.constant 0 : index
    %c0_8 = arith.constant 0 : index
    %c0_9 = arith.constant 0 : index
    %6 = vector.load %arg3[%c0_7, %c0_8, %c0_9] : memref<4x64x128xf32, #tpu.memory_space<vmem>>, vector<1x48x128xf32>
    %7 = vector.shape_cast %6 : vector<1x48x128xf32> to vector<48x128xf32>
    %cst = arith.constant dense<0.000000e+00> : vector<8x128xf32>
    %8 = tpu.matmul %5, %7, %cst {dimension_numbers = #tpu.dot_dimension_numbers<[1], [0], [0], [1], [0, 0, 1, 1], [], []>} : vector<8x48xf32>, vector<48x128xf32>, vector<8x128xf32> -> vector<8x128xf32>
    %c0_10 = arith.constant 0 : index
    %c0_11 = arith.constant 0 : index
    %c0_12 = arith.constant 0 : index
    %9 = vector.load %arg4[%c0_10, %c0_11, %c0_12] : memref<4x1x128xf32, #tpu.memory_space<vmem>>, vector<1x1x128xf32>
    %10 = vector.shape_cast %9 : vector<1x1x128xf32> to vector<1x128xf32>
    %11 = vector.broadcast %10 : vector<1x128xf32> to vector<8x128xf32>
    %12 = arith.addf %8, %11 : vector<8x128xf32>
    %cst_13 = arith.constant 5.000000e-01 : f32
    %13 = vector.broadcast %cst_13 : f32 to vector<8x128xf32>
    %14 = arith.mulf %13, %12 : vector<8x128xf32>
    %15 = math.tanh %14 : vector<8x128xf32>
    %cst_14 = arith.constant 5.000000e-01 : f32
    %16 = vector.broadcast %cst_14 : f32 to vector<8x128xf32>
    %17 = arith.mulf %16, %15 : vector<8x128xf32>
    %cst_15 = arith.constant 5.000000e-01 : f32
    %18 = vector.broadcast %cst_15 : f32 to vector<8x128xf32>
    %19 = arith.addf %17, %18 : vector<8x128xf32>
    %20 = math.tanh %12 : vector<8x128xf32>
    %21 = vector.extract_strided_slice %19 {offsets = [0, 0], sizes = [8, 32], strides = [1, 1]} : vector<8x128xf32> to vector<8x32xf32>
    %22 = vector.extract_strided_slice %19 {offsets = [0, 32], sizes = [8, 32], strides = [1, 1]} : vector<8x128xf32> to vector<8x32xf32>
    %23 = vector.extract_strided_slice %20 {offsets = [0, 64], sizes = [8, 32], strides = [1, 1]} : vector<8x128xf32> to vector<8x32xf32>
    %24 = vector.extract_strided_slice %19 {offsets = [0, 96], sizes = [8, 32], strides = [1, 1]} : vector<8x128xf32> to vector<8x32xf32>
    %25 = arith.mulf %22, %4 : vector<8x32xf32>
    %26 = arith.mulf %21, %23 : vector<8x32xf32>
    %27 = arith.addf %25, %26 : vector<8x32xf32>
    %28 = math.tanh %27 : vector<8x32xf32>
    %29 = arith.mulf %24, %28 : vector<8x32xf32>
    %c0_16 = arith.constant 0 : index
    %c0_17 = arith.constant 0 : index
    %c0_18 = arith.constant 0 : index
    %30 = vector.load %arg6[%c0_16, %c0_17, %c0_18] : memref<3x8x32xf32, #tpu.memory_space<vmem>>, vector<1x8x32xf32>
    %31 = vector.shape_cast %30 : vector<1x8x32xf32> to vector<8x32xf32>
    %32 = vector.shape_cast %29 : vector<8x32xf32> to vector<1x8x32xf32>
    tpu.vector_store %arg6[%c0_16, %c0_17, %c0_18], %32 {strides = array<i32>} : memref<3x8x32xf32, #tpu.memory_space<vmem>>, vector<1x8x32xf32>,
    %c0_19 = arith.constant 0 : index
    %c0_20 = arith.constant 0 : index
    %c0_21 = arith.constant 0 : index
    %33 = vector.load %arg7[%c0_19, %c0_20, %c0_21] : memref<3x8x32xf32, #tpu.memory_space<vmem>>, vector<1x8x32xf32>
    %34 = vector.shape_cast %33 : vector<1x8x32xf32> to vector<8x32xf32>
    %35 = vector.shape_cast %27 : vector<8x32xf32> to vector<1x8x32xf32>
    tpu.vector_store %arg7[%c0_19, %c0_20, %c0_21], %35 {strides = array<i32>} : memref<3x8x32xf32, #tpu.memory_space<vmem>>, vector<1x8x32xf32>,
    %c1 = arith.constant 1 : index
    %c0_22 = arith.constant 0 : index
    %c0_23 = arith.constant 0 : index
    %36 = vector.load %arg1[%c1, %c0_22, %c0_23] : memref<3x8x32xf32, #tpu.memory_space<vmem>>, vector<1x8x32xf32>
    %37 = vector.shape_cast %36 : vector<1x8x32xf32> to vector<8x32xf32>
    %c1_24 = arith.constant 1 : index
    %c0_25 = arith.constant 0 : index
    %c0_26 = arith.constant 0 : index
    %38 = vector.load %arg2[%c1_24, %c0_25, %c0_26] : memref<3x8x32xf32, #tpu.memory_space<vmem>>, vector<1x8x32xf32>
    %39 = vector.shape_cast %38 : vector<1x8x32xf32> to vector<8x32xf32>
    %40 = tpu.concatenate %29, %37 in 1 : vector<8x32xf32>, vector<8x32xf32> -> vector<8x64xf32>
    %c1_27 = arith.constant 1 : index
    %c0_28 = arith.constant 0 : index
    %c0_29 = arith.constant 0 : index
    %41 = vector.load %arg3[%c1_27, %c0_28, %c0_29] : memref<4x64x128xf32, #tpu.memory_space<vmem>>, vector<1x64x128xf32>
    %42 = vector.shape_cast %41 : vector<1x64x128xf32> to vector<64x128xf32>
    %cst_30 = arith.constant dense<0.000000e+00> : vector<8x128xf32>
    %43 = tpu.matmul %40, %42, %cst_30 {dimension_numbers = #tpu.dot_dimension_numbers<[1], [0], [0], [1], [0, 0, 1, 1], [], []>} : vector<8x64xf32>, vector<64x128xf32>, vector<8x128xf32> -> vector<8x128xf32>
    %c1_31 = arith.constant 1 : index
    %c0_32 = arith.constant 0 : index
    %c0_33 = arith.constant 0 : index
    %44 = vector.load %arg4[%c1_31, %c0_32, %c0_33] : memref<4x1x128xf32, #tpu.memory_space<vmem>>, vector<1x1x128xf32>
    %45 = vector.shape_cast %44 : vector<1x1x128xf32> to vector<1x128xf32>
    %46 = vector.broadcast %45 : vector<1x128xf32> to vector<8x128xf32>
    %47 = arith.addf %43, %46 : vector<8x128xf32>
    %cst_34 = arith.constant 5.000000e-01 : f32
    %48 = vector.broadcast %cst_34 : f32 to vector<8x128xf32>
    %49 = arith.mulf %48, %47 : vector<8x128xf32>
    %50 = math.tanh %49 : vector<8x128xf32>
    %cst_35 = arith.constant 5.000000e-01 : f32
    %51 = vector.broadcast %cst_35 : f32 to vector<8x128xf32>
    %52 = arith.mulf %51, %50 : vector<8x128xf32>
    %cst_36 = arith.constant 5.000000e-01 : f32
    %53 = vector.broadcast %cst_36 : f32 to vector<8x128xf32>
    %54 = arith.addf %52, %53 : vector<8x128xf32>
    %55 = math.tanh %47 : vector<8x128xf32>
    %56 = vector.extract_strided_slice %54 {offsets = [0, 0], sizes = [8, 32], strides = [1, 1]} : vector<8x128xf32> to vector<8x32xf32>
    %57 = vector.extract_strided_slice %54 {offsets = [0, 32], sizes = [8, 32], strides = [1, 1]} : vector<8x128xf32> to vector<8x32xf32>
    %58 = vector.extract_strided_slice %55 {offsets = [0, 64], sizes = [8, 32], strides = [1, 1]} : vector<8x128xf32> to vector<8x32xf32>
    %59 = vector.extract_strided_slice %54 {offsets = [0, 96], sizes = [8, 32], strides = [1, 1]} : vector<8x128xf32> to vector<8x32xf32>
    %60 = arith.mulf %57, %39 : vector<8x32xf32>
    %61 = arith.mulf %56, %58 : vector<8x32xf32>
    %62 = arith.addf %60, %61 : vector<8x32xf32>
    %63 = math.tanh %62 : vector<8x32xf32>
    %64 = arith.mulf %59, %63 : vector<8x32xf32>
    %c1_37 = arith.constant 1 : index
    %c0_38 = arith.constant 0 : index
    %c0_39 = arith.constant 0 : index
    %65 = vector.load %arg6[%c1_37, %c0_38, %c0_39] : memref<3x8x32xf32, #tpu.memory_space<vmem>>, vector<1x8x32xf32>
    %66 = vector.shape_cast %65 : vector<1x8x32xf32> to vector<8x32xf32>
    %67 = vector.shape_cast %64 : vector<8x32xf32> to vector<1x8x32xf32>
    tpu.vector_store %arg6[%c1_37, %c0_38, %c0_39], %67 {strides = array<i32>} : memref<3x8x32xf32, #tpu.memory_space<vmem>>, vector<1x8x32xf32>,
    %c1_40 = arith.constant 1 : index
    %c0_41 = arith.constant 0 : index
    %c0_42 = arith.constant 0 : index
    %68 = vector.load %arg7[%c1_40, %c0_41, %c0_42] : memref<3x8x32xf32, #tpu.memory_space<vmem>>, vector<1x8x32xf32>
    %69 = vector.shape_cast %68 : vector<1x8x32xf32> to vector<8x32xf32>
    %70 = vector.shape_cast %62 : vector<8x32xf32> to vector<1x8x32xf32>
    tpu.vector_store %arg7[%c1_40, %c0_41, %c0_42], %70 {strides = array<i32>} : memref<3x8x32xf32, #tpu.memory_space<vmem>>, vector<1x8x32xf32>,
    %c2 = arith.constant 2 : index
    %c0_43 = arith.constant 0 : index
    %c0_44 = arith.constant 0 : index
    %71 = vector.load %arg1[%c2, %c0_43, %c0_44] : memref<3x8x32xf32, #tpu.memory_space<vmem>>, vector<1x8x32xf32>
    %72 = vector.shape_cast %71 : vector<1x8x32xf32> to vector<8x32xf32>
    %c2_45 = arith.constant 2 : index
    %c0_46 = arith.constant 0 : index
    %c0_47 = arith.constant 0 : index
    %73 = vector.load %arg2[%c2_45, %c0_46, %c0_47] : memref<3x8x32xf32, #tpu.memory_space<vmem>>, vector<1x8x32xf32>
    %74 = vector.shape_cast %73 : vector<1x8x32xf32> to vector<8x32xf32>
    %75 = tpu.concatenate %64, %72 in 1 : vector<8x32xf32>, vector<8x32xf32> -> vector<8x64xf32>
    %c2_48 = arith.constant 2 : index
    %c0_49 = arith.constant 0 : index
    %c0_50 = arith.constant 0 : index
    %76 = vector.load %arg3[%c2_48, %c0_49, %c0_50] : memref<4x64x128xf32, #tpu.memory_space<vmem>>, vector<1x64x128xf32>
    %77 = vector.shape_cast %76 : vector<1x64x128xf32> to vector<64x128xf32>
    %cst_51 = arith.constant dense<0.000000e+00> : vector<8x128xf32>
    %78 = tpu.matmul %75, %77, %cst_51 {dimension_numbers = #tpu.dot_dimension_numbers<[1], [0], [0], [1], [0, 0, 1, 1], [], []>} : vector<8x64xf32>, vector<64x128xf32>, vector<8x128xf32> -> vector<8x128xf32>
    %c2_52 = arith.constant 2 : index
    %c0_53 = arith.constant 0 : index
    %c0_54 = arith.constant 0 : index
    %79 = vector.load %arg4[%c2_52, %c0_53, %c0_54] : memref<4x1x128xf32, #tpu.memory_space<vmem>>, vector<1x1x128xf32>
    %80 = vector.shape_cast %79 : vector<1x1x128xf32> to vector<1x128xf32>
    %81 = vector.broadcast %80 : vector<1x128xf32> to vector<8x128xf32>
    %82 = arith.addf %78, %81 : vector<8x128xf32>
    %cst_55 = arith.constant 5.000000e-01 : f32
    %83 = vector.broadcast %cst_55 : f32 to vector<8x128xf32>
    %84 = arith.mulf %83, %82 : vector<8x128xf32>
    %85 = math.tanh %84 : vector<8x128xf32>
    %cst_56 = arith.constant 5.000000e-01 : f32
    %86 = vector.broadcast %cst_56 : f32 to vector<8x128xf32>
    %87 = arith.mulf %86, %85 : vector<8x128xf32>
    %cst_57 = arith.constant 5.000000e-01 : f32
    %88 = vector.broadcast %cst_57 : f32 to vector<8x128xf32>
    %89 = arith.addf %87, %88 : vector<8x128xf32>
    %90 = math.tanh %82 : vector<8x128xf32>
    %91 = vector.extract_strided_slice %89 {offsets = [0, 0], sizes = [8, 32], strides = [1, 1]} : vector<8x128xf32> to vector<8x32xf32>
    %92 = vector.extract_strided_slice %89 {offsets = [0, 32], sizes = [8, 32], strides = [1, 1]} : vector<8x128xf32> to vector<8x32xf32>
    %93 = vector.extract_strided_slice %90 {offsets = [0, 64], sizes = [8, 32], strides = [1, 1]} : vector<8x128xf32> to vector<8x32xf32>
    %94 = vector.extract_strided_slice %89 {offsets = [0, 96], sizes = [8, 32], strides = [1, 1]} : vector<8x128xf32> to vector<8x32xf32>
    %95 = arith.mulf %92, %74 : vector<8x32xf32>
    %96 = arith.mulf %91, %93 : vector<8x32xf32>
    %97 = arith.addf %95, %96 : vector<8x32xf32>
    %98 = math.tanh %97 : vector<8x32xf32>
    %99 = arith.mulf %94, %98 : vector<8x32xf32>
    %c2_58 = arith.constant 2 : index
    %c0_59 = arith.constant 0 : index
    %c0_60 = arith.constant 0 : index
    %100 = vector.load %arg6[%c2_58, %c0_59, %c0_60] : memref<3x8x32xf32, #tpu.memory_space<vmem>>, vector<1x8x32xf32>
    %101 = vector.shape_cast %100 : vector<1x8x32xf32> to vector<8x32xf32>
    %102 = vector.shape_cast %99 : vector<8x32xf32> to vector<1x8x32xf32>
    tpu.vector_store %arg6[%c2_58, %c0_59, %c0_60], %102 {strides = array<i32>} : memref<3x8x32xf32, #tpu.memory_space<vmem>>, vector<1x8x32xf32>,
    %c2_61 = arith.constant 2 : index
    %c0_62 = arith.constant 0 : index
    %c0_63 = arith.constant 0 : index
    %103 = vector.load %arg7[%c2_61, %c0_62, %c0_63] : memref<3x8x32xf32, #tpu.memory_space<vmem>>, vector<1x8x32xf32>
    %104 = vector.shape_cast %103 : vector<1x8x32xf32> to vector<8x32xf32>
    %105 = vector.shape_cast %97 : vector<8x32xf32> to vector<1x8x32xf32>
    tpu.vector_store %arg7[%c2_61, %c0_62, %c0_63], %105 {strides = array<i32>} : memref<3x8x32xf32, #tpu.memory_space<vmem>>, vector<1x8x32xf32>,
    %c3 = arith.constant 3 : index
    %c0_64 = arith.constant 0 : index
    %c0_65 = arith.constant 0 : index
    %106 = vector.load %arg3[%c3, %c0_64, %c0_65] : memref<4x64x128xf32, #tpu.memory_space<vmem>>, vector<1x32x128xf32>
    %107 = vector.shape_cast %106 : vector<1x32x128xf32> to vector<32x128xf32>
    %cst_66 = arith.constant dense<0.000000e+00> : vector<8x128xf32>
    %108 = tpu.matmul %99, %107, %cst_66 {dimension_numbers = #tpu.dot_dimension_numbers<[1], [0], [0], [1], [0, 0, 1, 1], [], []>} : vector<8x32xf32>, vector<32x128xf32>, vector<8x128xf32> -> vector<8x128xf32>
    %c3_67 = arith.constant 3 : index
    %c0_68 = arith.constant 0 : index
    %c0_69 = arith.constant 0 : index
    %109 = vector.load %arg4[%c3_67, %c0_68, %c0_69] : memref<4x1x128xf32, #tpu.memory_space<vmem>>, vector<1x1x128xf32>
    %110 = vector.shape_cast %109 : vector<1x1x128xf32> to vector<1x128xf32>
    %111 = vector.broadcast %110 : vector<1x128xf32> to vector<8x128xf32>
    %112 = arith.addf %108, %111 : vector<8x128xf32>
    %113 = vector.extract_strided_slice %112 {offsets = [0, 0], sizes = [8, 16], strides = [1, 1]} : vector<8x128xf32> to vector<8x16xf32>
    %c0_70 = arith.constant 0 : index
    %c0_71 = arith.constant 0 : index
    %114 = vector.load %arg5[%c0_70, %c0_71] : memref<8x16xf32, #tpu.memory_space<vmem>>, vector<8x16xf32>
    tpu.vector_store %arg5[%c0_70, %c0_71], %113 {strides = array<i32>} : memref<8x16xf32, #tpu.memory_space<vmem>>, vector<8x16xf32>,
    return
  }
}

</mosaic_0001>

<llo_original>
// kernel: lstm_decoder_forward.1
$region0: #{lstm_decoder_forward.1}
  #allocation0 [shape = 'u32[]', space=smem, size = 0x4, offset = 0x4, fixed_abs, tag = 'smem constant byte address 0x4 - core index']
  #allocation1 [shape = 'u32[144,128]{1,0:T(1,128)}', space=vmem, size = 0x12000, scoped, tag = 'internal scratch']
  %s0 = inlined_call_operand.hbm [shape: f32[8,16], index: 0, kind: input, shape index: {}]
  %s1 = inlined_call_operand.hbm [shape: f32[3,8,32], index: 1, kind: input, shape index: {}]
  %s2 = inlined_call_operand.hbm [shape: f32[3,8,32], index: 2, kind: input, shape index: {}]
  %s3 = inlined_call_operand.hbm [shape: f32[4,64,128], index: 3, kind: input, shape index: {}]
  %s4 = inlined_call_operand.vmem [shape: f32[4,1,128], index: 4, kind: input, shape index: {}]
  %s5 = inlined_call_operand.hbm [shape: f32[8,16], index: 5, kind: output, shape index: {0}]
  %s6 = inlined_call_operand.hbm [shape: f32[3,8,32], index: 6, kind: output, shape index: {1}]
  %s7 = inlined_call_operand.hbm [shape: f32[3,8,32], index: 7, kind: output, shape index: {2}]
  %8 = xla_tuple %s5, %s6, %s7
  %s9 = sld [smem:[#allocation0]]
  $region62: #{lstm_decoder_forward.1} parent=0
    _
  %s11 = ssub.s32 1, %s9
  %s12 = scalar_select 0, %s11, %s9
  $region1: #{lstm_decoder_forward.1} parent=0
    #allocation2 [shape = 'u8[4096]{0}', space=vmem, size = 0x1000, scoped, tag = 'input window, operand 0, single buffered']
    #allocation3 [shape = 's32[1]{0}', space=sflag, size = 0x4, scoped, tag = 'scoped memory for lstm_decoder_forward.1']
    #allocation4 [shape = 's32[1]{0}', space=sflag, size = 0x4, scoped, tag = 'scoped memory for lstm_decoder_forward.1']
    #allocation5 [shape = 'u8[12288]{0}', space=vmem, size = 0x3000, scoped, tag = 'input window, operand 1, single buffered']
    #allocation6 [shape = 's32[1]{0}', space=sflag, size = 0x4, scoped, tag = 'scoped memory for lstm_decoder_forward.1']
    #allocation7 [shape = 'u8[12288]{0}', space=vmem, size = 0x3000, scoped, tag = 'input window, operand 2, single buffered']
    #allocation8 [shape = 'u8[131072]{0}', space=vmem, size = 0x20000, scoped, tag = 'input window, operand 3, single buffered']
    #allocation9 [shape = 's32[1]{0}', space=sflag, size = 0x4, scoped, tag = 'scoped memory for lstm_decoder_forward.1']
    #allocation10 [shape = 'u8[4096]{0}', space=vmem, size = 0x1000, scoped, tag = 'output window, operand 0, single buffered']
    #allocation11 [shape = 'u8[12288]{0}', space=vmem, size = 0x3000, scoped, tag = 'output window, operand 1, single buffered']
    #allocation12 [shape = 's32[1]{0}', space=sflag, size = 0x4, scoped, tag = 'scoped memory for lstm_decoder_forward.1']
    #allocation13 [shape = 'u8[12288]{0}', space=vmem, size = 0x3000, scoped, tag = 'output window, operand 2, single buffered']
    %13 = vsyncpa [#allocation3], 0
    %14 = vsyncpa [#allocation6], 0
    %15 = vsyncpa [#allocation9], 0
    %16 = vsyncpa [#allocation4], 0
    %17 = vsyncpa [#allocation12], 0
    // Predicated region
    $region2: #{lstm_decoder_forward.1} parent=1 // pred_check
      _
    $region3: #{lstm_decoder_forward.1} parent=1 // pred_check_branch
      %19 = sbr.rel (0) target = $region5
    $region4: #{lstm_decoder_forward.1} parent=1 // pred_region
      %s21 = ssub.s32 128, 128
      %22 = vsyncadd [#allocation3], %s21
      %s24 = sshll.u32 [#allocation2], 4
      %s25 = int_to_ptr.vmem [resolvable:$true] %s24
      %27 = dma.hbm_to_vmem [thread:$0]  %s0, 128, %s25, [#allocation3]
    $region5: #{lstm_decoder_forward.1} parent=1 // pred_fallthru
      _
    // Predicated region
    $region6: #{lstm_decoder_forward.1} parent=1 // pred_check
      _
    $region7: #{lstm_decoder_forward.1} parent=1 // pred_check_branch
      %29 = sbr.rel (0) target = $region9
    $region8: #{lstm_decoder_forward.1} parent=1 // pred_region
      %s31 = ssub.s32 384, 384
      %32 = vsyncadd [#allocation6], %s31
      %s33 = sshll.u32 [#allocation5], 4
      %s34 = int_to_ptr.vmem [resolvable:$true] %s33
      %39 = dma.hbm_to_vmem [thread:$0]  %s1, 384, %s34, [#allocation6], 128, 128, 8
    $region9: #{lstm_decoder_forward.1} parent=1 // pred_fallthru
      _
    // Predicated region
    $region10: #{lstm_decoder_forward.1} parent=1 // pred_check
      _
    $region11: #{lstm_decoder_forward.1} parent=1 // pred_check_branch
      %41 = sbr.rel (0) target = $region13
    $region12: #{lstm_decoder_forward.1} parent=1 // pred_region
      %s43 = ssub.s32 384, 384
      %44 = vsyncadd [#allocation6], %s43
      %s45 = sshll.u32 [#allocation7], 4
      %s46 = int_to_ptr.vmem [resolvable:$true] %s45
      %51 = dma.hbm_to_vmem [thread:$0]  %s2, 384, %s46, [#allocation6], 128, 128, 8
    $region13: #{lstm_decoder_forward.1} parent=1 // pred_fallthru
      _
    // Predicated region
    $region14: #{lstm_decoder_forward.1} parent=1 // pred_check
      _
    $region15: #{lstm_decoder_forward.1} parent=1 // pred_check_branch
      %53 = sbr.rel (0) target = $region17
    $region16: #{lstm_decoder_forward.1} parent=1 // pred_region
      %s55 = ssub.s32 4096, 4096
      %56 = vsyncadd [#allocation9], %s55
      %s57 = sshll.u32 [#allocation8], 4
      %s58 = int_to_ptr.vmem [resolvable:$true] %s57
      %63 = dma.hbm_to_vmem [thread:$0]  %s3, 4096, %s58, [#allocation9], 128, 128, 8
    $region17: #{lstm_decoder_forward.1} parent=1 // pred_fallthru
      _
    // Predicated region
    $region18: #{lstm_decoder_forward.1} parent=1 // pred_check
      _
    $region19: #{lstm_decoder_forward.1} parent=1 // pred_check_branch
      %65 = sbr.rel (0) target = $region21
    $region20: #{lstm_decoder_forward.1} parent=1 // pred_region
      _
    $region21: #{lstm_decoder_forward.1} parent=1 // pred_fallthru
      _
    // Predicated region
    $region22: #{lstm_decoder_forward.1} parent=1 // pred_check
      _
    $region23: #{lstm_decoder_forward.1} parent=1 // pred_check_branch
      %67 = sbr.rel (0) target = $region25
    $region24: #{lstm_decoder_forward.1} parent=1 // pred_region
      %68 = dma.done [#allocation3], 128
    $region25: #{lstm_decoder_forward.1} parent=1 // pred_fallthru
      _
    // Predicated region
    $region26: #{lstm_decoder_forward.1} parent=1 // pred_check
      _
    $region27: #{lstm_decoder_forward.1} parent=1 // pred_check_branch
      %70 = sbr.rel (0) target = $region29
    $region28: #{lstm_decoder_forward.1} parent=1 // pred_region
      %71 = dma.done [#allocation6], 384
    $region29: #{lstm_decoder_forward.1} parent=1 // pred_fallthru
      _
    // Predicated region
    $region30: #{lstm_decoder_forward.1} parent=1 // pred_check
      _
    $region31: #{lstm_decoder_forward.1} parent=1 // pred_check_branch
      %73 = sbr.rel (0) target = $region33
    $region32: #{lstm_decoder_forward.1} parent=1 // pred_region
      %74 = dma.done [#allocation6], 384
    $region33: #{lstm_decoder_forward.1} parent=1 // pred_fallthru
      _
    // Predicated region
    $region34: #{lstm_decoder_forward.1} parent=1 // pred_check
      _
    $region35: #{lstm_decoder_forward.1} parent=1 // pred_check_branch
      %76 = sbr.rel (0) target = $region37
    $region36: #{lstm_decoder_forward.1} parent=1 // pred_region
      %77 = dma.done [#allocation9], 4096
    $region37: #{lstm_decoder_forward.1} parent=1 // pred_fallthru
      _
    %v78 = vld [vmem:[#allocation2] sm:$0xff]
    %v79 = vld [vmem:[#allocation5] sm:$0xff]
    %v80 = vld [vmem:[#allocation7] sm:$0xff]
    %82 = vrot.lane.b32.xlu0 %v79, 16
    %v83 = vpop.permute.xlu0 %82
    %vm85 = vcmask 130048
    %v86 = vsel %vm85, %v78, %v83
    %v87 = vld [vmem:[#allocation8] sm:$0xff]
    %v88 = vld [vmem:[#allocation8 + $0x8] sm:$0xff]
    %v89 = vld [vmem:[#allocation8 + $0x10] sm:$0xff]
    %v90 = vld [vmem:[#allocation8 + $0x18] sm:$0xff]
    %v91 = vld [vmem:[#allocation8 + $0x20] sm:$0xff]
    %v92 = vld [vmem:[#allocation8 + $0x28] sm:$0xff]
    %v93 = vld [vmem:[%s4] sm:$0x1]
    %v95 = vlaneseq
    %v96 = vshrl.u32 %v95, 7
    %v97 = vsub.s32 0, %v96
    %v98 = vrot.slane %v93, %v97
    %vm100 = vcmask 392192
    %v102 = vsel %vm100, %v86, 0
    %104 = vmatprep.subr.mxu0 0.0
    %105 = vmatpush1.msra.mxu0 %v87
    %106 = vmatprep.subr.mxu0 0.0
    %107 = vmatpush1.msra.mxu0 %v88
    %108 = vmatprep.subr.mxu0 0.0
    %109 = vmatpush1.msra.mxu0 %v89
    %110 = vmatprep.subr.mxu0 0.0
    %111 = vmatpush1.msra.mxu0 %v90
    %112 = vmatprep.subr.mxu0 0.0
    %113 = vmatpush1.msra.mxu0 %v91
    %114 = vmatprep.subr.mxu0 0.0
    %115 = vmatpush1.msra.mxu0 %v92
    %116 = vmatprep.subr.mxu0 0.0
    %117 = vmatpush1.msra.mxu0 0.0
    %118 = vmatprep.subr.mxu0 0.0
    %119 = vmatpush1.msra.mxu0 0.0
    %120 = vmatprep.subr.mxu0 0.0
    %121 = vmatpush1.msra.mxu0 0.0
    %122 = vmatprep.subr.mxu0 0.0
    %123 = vmatpush1.msra.mxu0 0.0
    %124 = vmatprep.subr.mxu0 0.0
    %125 = vmatpush1.msra.mxu0 0.0
    %126 = vmatprep.subr.mxu0 0.0
    %127 = vmatpush1.msra.mxu0 0.0
    %128 = vmatprep.subr.mxu0 0.0
    %129 = vmatpush1.msra.mxu0 0.0
    %130 = vmatprep.subr.mxu0 0.0
    %131 = vmatpush1.msra.mxu0 0.0
    %132 = vmatprep.subr.mxu0 0.0
    %133 = vmatpush1.msra.mxu0 0.0
    %134 = vmatprep.subr.mxu0 0.0
    %135 = vmatpush1.msra.mxu0 0.0
    %136 = vmatprep.subr.mxu0 0.0
    %137 = vmatpush1.msra.mxu0 0.0
    %138 = vmatprep.subr.mxu0 0.0
    %139 = vmatpush1.msra.mxu0 0.0
    %140 = vmatprep.subr.mxu0 0.0
    %141 = vmatpush1.msra.mxu0 0.0
    %142 = vmatprep.subr.mxu0 0.0
    %143 = vmatpush1.msra.mxu0 0.0
    %144 = vmatprep.subr.mxu0 0.0
    %145 = vmatpush1.msra.mxu0 0.0
    %146 = vmatprep.subr.mxu0 0.0
    %147 = vmatpush1.msra.mxu0 0.0
    %148 = vmatprep.subr.mxu0 0.0
    %149 = vmatpush1.msra.mxu0 0.0
    %150 = vmatprep.subr.mxu0 0.0
    %151 = vmatpush1.msra.mxu0 0.0
    %152 = vmatprep.subr.mxu0 0.0
    %153 = vmatpush1.msra.mxu0 0.0
    %154 = vmatprep.subr.mxu0 0.0
    %155 = vmatpush1.msra.mxu0 0.0
    %156 = vmatprep.subr.mxu0 0.0
    %157 = vmatpush1.msra.mxu0 0.0
    %158 = vmatprep.subr.mxu0 0.0
    %159 = vmatpush1.msra.mxu0 0.0
    %160 = vmatprep.subr.mxu0 0.0
    %161 = vmatpush1.msra.mxu0 0.0
    %162 = vmatprep.subr.mxu0 0.0
    %163 = vmatpush1.msra.mxu0 0.0
    %164 = vmatprep.subr.mxu0 0.0
    %165 = vmatpush1.msra.mxu0 0.0
    %166 = vmatprep.subr.mxu0 0.0
    %167 = vmatpush1.msra.mxu0 0.0
    %168 = vmatprep.mubr.f32.mxu0 0.0
    %169 = vmatmul.mubr.f32.gmra.mrb[0].mxu0 %v102
    %v170 = vpop.f32.mrb[0].mxu0
    %v171 = vadd.f32 %v98, %v170
    %v172 = vpop.f32.mrb[0].mxu0
    %173 = vdwg.mxu0
    %v174 = vmul.f32 %v171, 0.5
    %v175 = vtanh.pop %v174
    %v176 = vmul.f32 %v175, 0.5
    %v177 = vadd.f32 %v176, 0.5
    %v178 = vtanh.pop %v171
    %180 = vrot.lane.b32.xlu0 %v80, 32
    %v181 = vpop.permute.xlu0 %180
    %v183 = vmul.f32 %v177, %v181
    %185 = vrot.lane.b32.xlu0 %v178, 64
    %v186 = vpop.permute.xlu0 %185
    %v188 = vmul.f32 %v177, %v186
    %190 = vrot.lane.b32.xlu0 %v188, 32
    %v191 = vpop.permute.xlu0 %190
    %v193 = vadd.f32 %v183, %v191
    %v194 = vtanh.pop %v193
    %196 = vrot.lane.b32.xlu0 %v194, 64
    %v197 = vpop.permute.xlu0 %196
    %v199 = vmul.f32 %v177, %v197
    %201 = vrot.lane.b32.xlu0 %v199, 32
    %v202 = vpop.permute.xlu0 %201
    %vm204 = vcmask 261120
    %205 = vst.msk [vmem:[#allocation11] sm:$0xff] %vm204, %v202
    %207 = vrot.lane.b32.xlu0 %v193, 96
    %v208 = vpop.permute.xlu0 %207
    %210 = vst.msk [vmem:[#allocation13] sm:$0xff] %vm204, %v208
    %s211 = scalar_lea.vmem [#allocation5], 8
    %v212 = vld [vmem:[%s211] sm:$0xff]
    %s213 = scalar_lea.vmem [#allocation7], 8
    %v214 = vld [vmem:[%s213] sm:$0xff]
    %216 = vrot.lane.b32.xlu0 %v212, 32
    %v217 = vpop.permute.xlu0 %216
    %v219 = vsel %vm204, %v202, %v217
    %s220 = scalar_lea.vmem [#allocation8], 64
    %v221 = vld [vmem:[%s220] sm:$0xff]
    %v222 = vld [vmem:[%s220 + $0x8] sm:$0xff]
    %v223 = vld [vmem:[%s220 + $0x10] sm:$0xff]
    %v224 = vld [vmem:[%s220 + $0x18] sm:$0xff]
    %v225 = vld [vmem:[%s220 + $0x20] sm:$0xff]
    %v226 = vld [vmem:[%s220 + $0x28] sm:$0xff]
    %v227 = vld [vmem:[%s220 + $0x30] sm:$0xff]
    %v228 = vld [vmem:[%s220 + $0x38] sm:$0xff]
    %s229 = scalar_lea.vmem %s4, 1
    %v230 = vld [vmem:[%s229] sm:$0x1]
    %v232 = vlaneseq
    %v233 = vshrl.u32 %v232, 7
    %v234 = vsub.s32 0, %v233
    %v235 = vrot.slane %v230, %v234
    %vm237 = vcmask 523264
    %v239 = vsel %vm237, %v219, 0
    %241 = vmatprep.subr.mxu0 0.0
    %242 = vmatpush1.msra.mxu0 %v221
    %243 = vmatprep.subr.mxu0 0.0
    %244 = vmatpush1.msra.mxu0 %v222
    %245 = vmatprep.subr.mxu0 0.0
    %246 = vmatpush1.msra.mxu0 %v223
    %247 = vmatprep.subr.mxu0 0.0
    %248 = vmatpush1.msra.mxu0 %v224
    %249 = vmatprep.subr.mxu0 0.0
    %250 = vmatpush1.msra.mxu0 %v225
    %251 = vmatprep.subr.mxu0 0.0
    %252 = vmatpush1.msra.mxu0 %v226
    %253 = vmatprep.subr.mxu0 0.0
    %254 = vmatpush1.msra.mxu0 %v227
    %255 = vmatprep.subr.mxu0 0.0
    %256 = vmatpush1.msra.mxu0 %v228
    %257 = vmatprep.subr.mxu0 0.0
    %258 = vmatpush1.msra.mxu0 0.0
    %259 = vmatprep.subr.mxu0 0.0
    %260 = vmatpush1.msra.mxu0 0.0
    %261 = vmatprep.subr.mxu0 0.0
    %262 = vmatpush1.msra.mxu0 0.0
    %263 = vmatprep.subr.mxu0 0.0
    %264 = vmatpush1.msra.mxu0 0.0
    %265 = vmatprep.subr.mxu0 0.0
    %266 = vmatpush1.msra.mxu0 0.0
    %267 = vmatprep.subr.mxu0 0.0
    %268 = vmatpush1.msra.mxu0 0.0
    %269 = vmatprep.subr.mxu0 0.0
    %270 = vmatpush1.msra.mxu0 0.0
    %271 = vmatprep.subr.mxu0 0.0
    %272 = vmatpush1.msra.mxu0 0.0
    %273 = vmatprep.subr.mxu0 0.0
    %274 = vmatpush1.msra.mxu0 0.0
    %275 = vmatprep.subr.mxu0 0.0
    %276 = vmatpush1.msra.mxu0 0.0
    %277 = vmatprep.subr.mxu0 0.0
    %278 = vmatpush1.msra.mxu0 0.0
    %279 = vmatprep.subr.mxu0 0.0
    %280 = vmatpush1.msra.mxu0 0.0
    %281 = vmatprep.subr.mxu0 0.0
    %282 = vmatpush1.msra.mxu0 0.0
    %283 = vmatprep.subr.mxu0 0.0
    %284 = vmatpush1.msra.mxu0 0.0
    %285 = vmatprep.subr.mxu0 0.0
    %286 = vmatpush1.msra.mxu0 0.0
    %287 = vmatprep.subr.mxu0 0.0
    %288 = vmatpush1.msra.mxu0 0.0
    %289 = vmatprep.subr.mxu0 0.0
    %290 = vmatpush1.msra.mxu0 0.0
    %291 = vmatprep.subr.mxu0 0.0
    %292 = vmatpush1.msra.mxu0 0.0
    %293 = vmatprep.subr.mxu0 0.0
    %294 = vmatpush1.msra.mxu0 0.0
    %295 = vmatprep.subr.mxu0 0.0
    %296 = vmatpush1.msra.mxu0 0.0
    %297 = vmatprep.subr.mxu0 0.0
    %298 = vmatpush1.msra.mxu0 0.0
    %299 = vmatprep.subr.mxu0 0.0
    %300 = vmatpush1.msra.mxu0 0.0
    %301 = vmatprep.subr.mxu0 0.0
    %302 = vmatpush1.msra.mxu0 0.0
    %303 = vmatprep.subr.mxu0 0.0
    %304 = vmatpush1.msra.mxu0 0.0
    %305 = vmatprep.mubr.f32.mxu0 0.0
    %306 = vmatmul.mubr.f32.gmra.mrb[0].mxu0 %v239
    %v307 = vpop.f32.mrb[0].mxu0
    %v308 = vadd.f32 %v235, %v307
    %v309 = vpop.f32.mrb[0].mxu0
    %310 = vdwg.mxu0
    %v311 = vmul.f32 %v308, 0.5
    %v312 = vtanh.pop %v311
    %v313 = vmul.f32 %v312, 0.5
    %v314 = vadd.f32 %v313, 0.5
    %v315 = vtanh.pop %v308
    %317 = vrot.lane.b32.xlu0 %v214, 32
    %v318 = vpop.permute.xlu0 %317
    %v320 = vmul.f32 %v314, %v318
    %322 = vrot.lane.b32.xlu0 %v315, 64
    %v323 = vpop.permute.xlu0 %322
    %v325 = vmul.f32 %v314, %v323
    %327 = vrot.lane.b32.xlu0 %v325, 32
    %v328 = vpop.permute.xlu0 %327
    %v330 = vadd.f32 %v320, %v328
    %v331 = vtanh.pop %v330
    %333 = vrot.lane.b32.xlu0 %v331, 64
    %v334 = vpop.permute.xlu0 %333
    %v336 = vmul.f32 %v314, %v334
    %338 = vrot.lane.b32.xlu0 %v336, 32
    %v339 = vpop.permute.xlu0 %338
    %s341 = scalar_lea.vmem [#allocation11], 8
    %342 = vst.msk [vmem:[%s341] sm:$0xff] %vm204, %v339
    %344 = vrot.lane.b32.xlu0 %v330, 96
    %v345 = vpop.permute.xlu0 %344
    %s347 = scalar_lea.vmem [#allocation13], 8
    %348 = vst.msk [vmem:[%s347] sm:$0xff] %vm204, %v345
    %s349 = scalar_lea.vmem [#allocation5], 16
    %v350 = vld [vmem:[%s349] sm:$0xff]
    %s351 = scalar_lea.vmem [#allocation7], 16
    %v352 = vld [vmem:[%s351] sm:$0xff]
    %354 = vrot.lane.b32.xlu0 %v350, 32
    %v355 = vpop.permute.xlu0 %354
    %v357 = vsel %vm204, %v339, %v355
    %s358 = scalar_lea.vmem [#allocation8], 128
    %v359 = vld [vmem:[%s358] sm:$0xff]
    %v360 = vld [vmem:[%s358 + $0x8] sm:$0xff]
    %v361 = vld [vmem:[%s358 + $0x10] sm:$0xff]
    %v362 = vld [vmem:[%s358 + $0x18] sm:$0xff]
    %v363 = vld [vmem:[%s358 + $0x20] sm:$0xff]
    %v364 = vld [vmem:[%s358 + $0x28] sm:$0xff]
    %v365 = vld [vmem:[%s358 + $0x30] sm:$0xff]
    %v366 = vld [vmem:[%s358 + $0x38] sm:$0xff]
    %s367 = scalar_lea.vmem %s4, 2
    %v368 = vld [vmem:[%s367] sm:$0x1]
    %v370 = vlaneseq
    %v371 = vshrl.u32 %v370, 7
    %v372 = vsub.s32 0, %v371
    %v373 = vrot.slane %v368, %v372
    %v376 = vsel %vm237, %v357, 0
    %378 = vmatprep.subr.mxu0 0.0
    %379 = vmatpush1.msra.mxu0 %v359
    %380 = vmatprep.subr.mxu0 0.0
    %381 = vmatpush1.msra.mxu0 %v360
    %382 = vmatprep.subr.mxu0 0.0
    %383 = vmatpush1.msra.mxu0 %v361
    %384 = vmatprep.subr.mxu0 0.0
    %385 = vmatpush1.msra.mxu0 %v362
    %386 = vmatprep.subr.mxu0 0.0
    %387 = vmatpush1.msra.mxu0 %v363
    %388 = vmatprep.subr.mxu0 0.0
    %389 = vmatpush1.msra.mxu0 %v364
    %390 = vmatprep.subr.mxu0 0.0
    %391 = vmatpush1.msra.mxu0 %v365
    %392 = vmatprep.subr.mxu0 0.0
    %393 = vmatpush1.msra.mxu0 %v366
    %394 = vmatprep.subr.mxu0 0.0
    %395 = vmatpush1.msra.mxu0 0.0
    %396 = vmatprep.subr.mxu0 0.0
    %397 = vmatpush1.msra.mxu0 0.0
    %398 = vmatprep.subr.mxu0 0.0
    %399 = vmatpush1.msra.mxu0 0.0
    %400 = vmatprep.subr.mxu0 0.0
    %401 = vmatpush1.msra.mxu0 0.0
    %402 = vmatprep.subr.mxu0 0.0
    %403 = vmatpush1.msra.mxu0 0.0
    %404 = vmatprep.subr.mxu0 0.0
    %405 = vmatpush1.msra.mxu0 0.0
    %406 = vmatprep.subr.mxu0 0.0
    %407 = vmatpush1.msra.mxu0 0.0
    %408 = vmatprep.subr.mxu0 0.0
    %409 = vmatpush1.msra.mxu0 0.0
    %410 = vmatprep.subr.mxu0 0.0
    %411 = vmatpush1.msra.mxu0 0.0
    %412 = vmatprep.subr.mxu0 0.0
    %413 = vmatpush1.msra.mxu0 0.0
    %414 = vmatprep.subr.mxu0 0.0
    %415 = vmatpush1.msra.mxu0 0.0
    %416 = vmatprep.subr.mxu0 0.0
    %417 = vmatpush1.msra.mxu0 0.0
    %418 = vmatprep.subr.mxu0 0.0
    %419 = vmatpush1.msra.mxu0 0.0
    %420 = vmatprep.subr.mxu0 0.0
    %421 = vmatpush1.msra.mxu0 0.0
    %422 = vmatprep.subr.mxu0 0.0
    %423 = vmatpush1.msra.mxu0 0.0
    %424 = vmatprep.subr.mxu0 0.0
    %425 = vmatpush1.msra.mxu0 0.0
    %426 = vmatprep.subr.mxu0 0.0
    %427 = vmatpush1.msra.mxu0 0.0
    %428 = vmatprep.subr.mxu0 0.0
    %429 = vmatpush1.msra.mxu0 0.0
    %430 = vmatprep.subr.mxu0 0.0
    %431 = vmatpush1.msra.mxu0 0.0
    %432 = vmatprep.subr.mxu0 0.0
    %433 = vmatpush1.msra.mxu0 0.0
    %434 = vmatprep.subr.mxu0 0.0
    %435 = vmatpush1.msra.mxu0 0.0
    %436 = vmatprep.subr.mxu0 0.0
    %437 = vmatpush1.msra.mxu0 0.0
    %438 = vmatprep.subr.mxu0 0.0
    %439 = vmatpush1.msra.mxu0 0.0
    %440 = vmatprep.subr.mxu0 0.0
    %441 = vmatpush1.msra.mxu0 0.0
    %442 = vmatprep.mubr.f32.mxu0 0.0
    %443 = vmatmul.mubr.f32.gmra.mrb[0].mxu0 %v376
    %v444 = vpop.f32.mrb[0].mxu0
    %v445 = vadd.f32 %v373, %v444
    %v446 = vpop.f32.mrb[0].mxu0
    %447 = vdwg.mxu0
    %v448 = vmul.f32 %v445, 0.5
    %v449 = vtanh.pop %v448
    %v450 = vmul.f32 %v449, 0.5
    %v451 = vadd.f32 %v450, 0.5
    %v452 = vtanh.pop %v445
    %454 = vrot.lane.b32.xlu0 %v352, 32
    %v455 = vpop.permute.xlu0 %454
    %v457 = vmul.f32 %v451, %v455
    %459 = vrot.lane.b32.xlu0 %v452, 64
    %v460 = vpop.permute.xlu0 %459
    %v462 = vmul.f32 %v451, %v460
    %464 = vrot.lane.b32.xlu0 %v462, 32
    %v465 = vpop.permute.xlu0 %464
    %v467 = vadd.f32 %v457, %v465
    %v468 = vtanh.pop %v467
    %470 = vrot.lane.b32.xlu0 %v468, 64
    %v471 = vpop.permute.xlu0 %470
    %v473 = vmul.f32 %v451, %v471
    %475 = vrot.lane.b32.xlu0 %v473, 32
    %v476 = vpop.permute.xlu0 %475
    %s478 = scalar_lea.vmem [#allocation11], 16
    %479 = vst.msk [vmem:[%s478] sm:$0xff] %vm204, %v476
    %481 = vrot.lane.b32.xlu0 %v467, 96
    %v482 = vpop.permute.xlu0 %481
    %s484 = scalar_lea.vmem [#allocation13], 16
    %485 = vst.msk [vmem:[%s484] sm:$0xff] %vm204, %v482
    %s486 = scalar_lea.vmem [#allocation8], 192
    %v487 = vld [vmem:[%s486] sm:$0xff]
    %v488 = vld [vmem:[%s486 + $0x8] sm:$0xff]
    %v489 = vld [vmem:[%s486 + $0x10] sm:$0xff]
    %v490 = vld [vmem:[%s486 + $0x18] sm:$0xff]
    %s491 = scalar_lea.vmem %s4, 3
    %v492 = vld [vmem:[%s491] sm:$0x1]
    %v494 = vlaneseq
    %v495 = vshrl.u32 %v494, 7
    %v496 = vsub.s32 0, %v495
    %v497 = vrot.slane %v492, %v496
    %v499 = vsel %vm204, %v476, 0
    %501 = vmatprep.subr.mxu0 0.0
    %502 = vmatpush1.msra.mxu0 %v487
    %503 = vmatprep.subr.mxu0 0.0
    %504 = vmatpush1.msra.mxu0 %v488
    %505 = vmatprep.subr.mxu0 0.0
    %506 = vmatpush1.msra.mxu0 %v489
    %507 = vmatprep.subr.mxu0 0.0
    %508 = vmatpush1.msra.mxu0 %v490
    %509 = vmatprep.subr.mxu0 0.0
    %510 = vmatpush1.msra.mxu0 0.0
    %511 = vmatprep.subr.mxu0 0.0
    %512 = vmatpush1.msra.mxu0 0.0
    %513 = vmatprep.subr.mxu0 0.0
    %514 = vmatpush1.msra.mxu0 0.0
    %515 = vmatprep.subr.mxu0 0.0
    %516 = vmatpush1.msra.mxu0 0.0
    %517 = vmatprep.subr.mxu0 0.0
    %518 = vmatpush1.msra.mxu0 0.0
    %519 = vmatprep.subr.mxu0 0.0
    %520 = vmatpush1.msra.mxu0 0.0
    %521 = vmatprep.subr.mxu0 0.0
    %522 = vmatpush1.msra.mxu0 0.0
    %523 = vmatprep.subr.mxu0 0.0
    %524 = vmatpush1.msra.mxu0 0.0
    %525 = vmatprep.subr.mxu0 0.0
    %526 = vmatpush1.msra.mxu0 0.0
    %527 = vmatprep.subr.mxu0 0.0
    %528 = vmatpush1.msra.mxu0 0.0
    %529 = vmatprep.subr.mxu0 0.0
    %530 = vmatpush1.msra.mxu0 0.0
    %531 = vmatprep.subr.mxu0 0.0
    %532 = vmatpush1.msra.mxu0 0.0
    %533 = vmatprep.subr.mxu0 0.0
    %534 = vmatpush1.msra.mxu0 0.0
    %535 = vmatprep.subr.mxu0 0.0
    %536 = vmatpush1.msra.mxu0 0.0
    %537 = vmatprep.subr.mxu0 0.0
    %538 = vmatpush1.msra.mxu0 0.0
    %539 = vmatprep.subr.mxu0 0.0
    %540 = vmatpush1.msra.mxu0 0.0
    %541 = vmatprep.subr.mxu0 0.0
    %542 = vmatpush1.msra.mxu0 0.0
    %543 = vmatprep.subr.mxu0 0.0
    %544 = vmatpush1.msra.mxu0 0.0
    %545 = vmatprep.subr.mxu0 0.0
    %546 = vmatpush1.msra.mxu0 0.0
    %547 = vmatprep.subr.mxu0 0.0
    %548 = vmatpush1.msra.mxu0 0.0
    %549 = vmatprep.subr.mxu0 0.0
    %550 = vmatpush1.msra.mxu0 0.0
    %551 = vmatprep.subr.mxu0 0.0
    %552 = vmatpush1.msra.mxu0 0.0
    %553 = vmatprep.subr.mxu0 0.0
    %554 = vmatpush1.msra.mxu0 0.0
    %555 = vmatprep.subr.mxu0 0.0
    %556 = vmatpush1.msra.mxu0 0.0
    %557 = vmatprep.subr.mxu0 0.0
    %558 = vmatpush1.msra.mxu0 0.0
    %559 = vmatprep.subr.mxu0 0.0
    %560 = vmatpush1.msra.mxu0 0.0
    %561 = vmatprep.subr.mxu0 0.0
    %562 = vmatpush1.msra.mxu0 0.0
    %563 = vmatprep.subr.mxu0 0.0
    %564 = vmatpush1.msra.mxu0 0.0
    %565 = vmatprep.mubr.f32.mxu0 0.0
    %566 = vmatmul.mubr.f32.gmra.mrb[0].mxu0 %v499
    %v567 = vpop.f32.mrb[0].mxu0
    %v568 = vadd.f32 %v497, %v567
    %v569 = vpop.f32.mrb[0].mxu0
    %570 = vdwg.mxu0
    %571 = vst.msk [vmem:[#allocation10] sm:$0xff] %vm85, %v568
    // Predicated region
    $region38: #{lstm_decoder_forward.1} parent=1 // pred_check
      _
    $region39: #{lstm_decoder_forward.1} parent=1 // pred_check_branch
      %573 = sbr.rel (0) target = $region41
    $region40: #{lstm_decoder_forward.1} parent=1 // pred_region
      %s575 = ssub.s32 128, 128
      %576 = vsyncadd [#allocation4], %s575
      %s578 = sshll.u32 [#allocation10], 4
      %s579 = int_to_ptr.vmem [resolvable:$true] %s578
      %581 = dma.vmem_to_hbm [thread:$0]  %s579, 128, %s5, [#allocation4]
    $region41: #{lstm_decoder_forward.1} parent=1 // pred_fallthru
      _
    // Predicated region
    $region42: #{lstm_decoder_forward.1} parent=1 // pred_check
      _
    $region43: #{lstm_decoder_forward.1} parent=1 // pred_check_branch
      %583 = sbr.rel (0) target = $region45
    $region44: #{lstm_decoder_forward.1} parent=1 // pred_region
      %s585 = ssub.s32 384, 384
      %586 = vsyncadd [#allocation12], %s585
      %s587 = sshll.u32 [#allocation11], 4
      %s588 = int_to_ptr.vmem [resolvable:$true] %s587
      %593 = dma.vmem_to_hbm [thread:$0]  %s588, 384, %s6, [#allocation12], 128, 128, 8
    $region45: #{lstm_decoder_forward.1} parent=1 // pred_fallthru
      _
    // Predicated region
    $region46: #{lstm_decoder_forward.1} parent=1 // pred_check
      _
    $region47: #{lstm_decoder_forward.1} parent=1 // pred_check_branch
      %595 = sbr.rel (0) target = $region49
    $region48: #{lstm_decoder_forward.1} parent=1 // pred_region
      %s597 = ssub.s32 384, 384
      %598 = vsyncadd [#allocation12], %s597
      %s599 = sshll.u32 [#allocation13], 4
      %s600 = int_to_ptr.vmem [resolvable:$true] %s599
      %605 = dma.vmem_to_hbm [thread:$0]  %s600, 384, %s7, [#allocation12], 128, 128, 8
    $region49: #{lstm_decoder_forward.1} parent=1 // pred_fallthru
      _
    // Predicated region
    $region50: #{lstm_decoder_forward.1} parent=1 // pred_check
      _
    $region51: #{lstm_decoder_forward.1} parent=1 // pred_check_branch
      %607 = sbr.rel (0) target = $region53
    $region52: #{lstm_decoder_forward.1} parent=1 // pred_region
      %608 = dma.done [#allocation4], 128
    $region53: #{lstm_decoder_forward.1} parent=1 // pred_fallthru
      _
    // Predicated region
    $region54: #{lstm_decoder_forward.1} parent=1 // pred_check
      _
    $region55: #{lstm_decoder_forward.1} parent=1 // pred_check_branch
      %610 = sbr.rel (0) target = $region57
    $region56: #{lstm_decoder_forward.1} parent=1 // pred_region
      %611 = dma.done [#allocation12], 384
    $region57: #{lstm_decoder_forward.1} parent=1 // pred_fallthru
      _
    // Predicated region
    $region58: #{lstm_decoder_forward.1} parent=1 // pred_check
      _
    $region59: #{lstm_decoder_forward.1} parent=1 // pred_check_branch
      %613 = sbr.rel (0) target = $region61
    $region60: #{lstm_decoder_forward.1} parent=1 // pred_region
      %614 = dma.done [#allocation12], 384
    $region61: #{lstm_decoder_forward.1} parent=1 // pred_fallthru
      _
    %615 = vsyncpa [#allocation3], 1
    %616 = vsyncpa [#allocation6], 1
    %617 = vsyncpa [#allocation9], 1
    %618 = vsyncpa [#allocation4], 1
    %619 = vsyncpa [#allocation12], 1

</llo_original>
